<compile_context>
chip_gen: v7x
topology: tpu7x:2x2x1
jax: 0.10.0
libtpu: 0.0.40
codegen_flags: <defaults>
</compile_context>

<pallas_src>
import jax
import jax.numpy as jnp
from jax.experimental import pallas as pl
from jax.experimental.pallas import tpu as pltpu


def _self_attn_kernel(x_ref, wq_ref, wk_ref, wv_ref, wo_ref, b_ref,
                      o_ref, acc_ref):
    """Grid = (batch, heads).  One step = one head of one batch element."""
    h = pl.program_id(1)
    num_heads = pl.num_programs(1)

    # Initialize the per-batch output accumulator on the first head.
    @pl.when(h == 0)
    def _init():
        acc_ref[...] = jnp.zeros_like(acc_ref)

    x = x_ref[0].astype(jnp.bfloat16)                                 # (n, dim)

    # Per-head projections (softmax scale already folded into wq).
    q = jnp.dot(x, wq_ref[0], preferred_element_type=jnp.float32)     # (n, d)
    k = jnp.dot(x, wk_ref[0], preferred_element_type=jnp.float32)     # (n, d)
    v = jnp.dot(x, wv_ref[0], preferred_element_type=jnp.float32)     # (n, d)

    # dots = q @ k^T without materializing a transpose: contract last dims.
    dots = jax.lax.dot_general(
        q.astype(jnp.bfloat16), k.astype(jnp.bfloat16),
        dimension_numbers=(((1,), (1,)), ((), ())),
        preferred_element_type=jnp.float32)                           # (n, n) f32

    # Numerically stable softmax in f32; divide via approx reciprocal (EUP).
    m = jnp.max(dots, axis=-1, keepdims=True)
    e = jnp.exp(dots - m)
    s = jnp.sum(e, axis=-1, keepdims=True)
    attn = e * pl.reciprocal(s, approx=True)

    out_h = jnp.dot(attn.astype(jnp.bfloat16), v.astype(jnp.bfloat16),
                    preferred_element_type=jnp.float32)               # (n, d)

    # This head's contribution to the output projection, accumulated in f32.
    acc_ref[...] += jnp.dot(out_h.astype(jnp.bfloat16), wo_ref[0],
                            preferred_element_type=jnp.float32)       # (n, dim)

    # Last head: add bias, cast, store.  Dropout(p=0.0) is the identity.
    @pl.when(h == num_heads - 1)
    def _finalize():
        o_ref[0] = (acc_ref[...] + b_ref[...]).astype(o_ref.dtype)


def self_attention(x, w_qkv, w_out, b_out, *, heads, dim_head):
    """x: (b, n, dim); w_qkv: (dim, 3*heads*dim_head);
       w_out: (heads*dim_head, dim); b_out: (1, dim)."""
    b, n, dim = x.shape
    inner = heads * dim_head
    scale = dim_head ** (-0.5)

    # Trace-time weight prep (free): split per head, fold the softmax scale
    # into the q weights, hand the MXU bf16 operands.
    wq, wk, wv = jnp.split(w_qkv, 3, axis=-1)                 # (dim, inner) each

    def per_head(w):                                          # -> (heads, dim, d)
        return jnp.transpose(w.reshape(dim, heads, dim_head), (1, 0, 2))

    wq3 = per_head(wq * scale).astype(jnp.bfloat16)
    wk3 = per_head(wk).astype(jnp.bfloat16)
    wv3 = per_head(wv).astype(jnp.bfloat16)
    wo3 = w_out.reshape(heads, dim_head, dim).astype(jnp.bfloat16)   # (heads, d, dim)
    bias = b_out.astype(jnp.float32)                                 # (1, dim)

    flops = b * heads * (3 * 2 * n * dim * dim_head      # q/k/v projections
                         + 2 * n * n * dim_head          # q @ k^T
                         + 2 * n * n * dim_head          # attn @ v
                         + 2 * n * dim_head * dim)       # output projection
    transcendentals = b * heads * n * (n + 1)            # exp + reciprocal
    bytes_accessed = (b * n * dim * x.dtype.itemsize * 2          # x in, out
                      + b * 2 * (wq3.size + wk3.size + wv3.size + wo3.size)
                      + bias.size * 4)

    # TODO(synk): for long sequences (n >~ 2k) add flash-style KV tiling
    # (online softmax over a KV grid axis) so the (n, n) logits never exceed
    # v7x's 64 MiB VMEM; for very small n, block several batch rows per step
    # to amortize the ~0.35 us per-grid-step overhead.
    return pl.pallas_call(
        _self_attn_kernel,
        out_shape=jax.ShapeDtypeStruct((b, n, dim), x.dtype),
        grid_spec=pltpu.PrefetchScalarGridSpec(
            num_scalar_prefetch=0,
            grid=(b, heads),
            in_specs=[
                pl.BlockSpec((1, n, dim), lambda i, h: (i, 0, 0)),         # x (reused across h)
                pl.BlockSpec((1, dim, dim_head), lambda i, h: (h, 0, 0)),  # w_q[h]
                pl.BlockSpec((1, dim, dim_head), lambda i, h: (h, 0, 0)),  # w_k[h]
                pl.BlockSpec((1, dim, dim_head), lambda i, h: (h, 0, 0)),  # w_v[h]
                pl.BlockSpec((1, dim_head, dim), lambda i, h: (h, 0, 0)),  # w_out[h]
                pl.BlockSpec((1, dim), lambda i, h: (0, 0)),               # bias (resident)
            ],
            out_specs=pl.BlockSpec((1, n, dim), lambda i, h: (i, 0, 0)),
            scratch_shapes=[pltpu.VMEM((n, dim), jnp.float32)],
        ),
        compiler_params=pltpu.CompilerParams(
            dimension_semantics=("parallel", "arbitrary")),
        cost_estimate=pl.CostEstimate(
            flops=flops,
            transcendentals=transcendentals,
            bytes_accessed=bytes_accessed),
    )(x, wq3, wk3, wv3, wo3, bias)


def _reference(x, w_qkv, w_out, b_out, *, heads, dim_head):
    """Pure-JAX f32 reference matching the PyTorch module's forward."""
    b, n, dim = x.shape
    inner = heads * dim_head
    scale = dim_head ** (-0.5)
    qkv = x @ w_qkv                                                  # (b, n, 3*inner)
    q, k, v = jnp.split(qkv, 3, axis=-1)

    def to_heads(t):
        return t.reshape(b, n, heads, dim_head).transpose(0, 2, 1, 3)

    q, k, v = map(to_heads, (q, k, v))
    dots = jnp.einsum('bhid,bhjd->bhij', q, k) * scale
    attn = jax.nn.softmax(dots, axis=-1)
    out = jnp.einsum('bhij,bhjd->bhid', attn, v)
    out = out.transpose(0, 2, 1, 3).reshape(b, n, inner)
    return out @ w_out + b_out[0]


if __name__ == "__main__":
    # Small shapes consistent with the module's forward: x is (b, n, dim).
    batch, seq, dim = 2, 8, 32
    heads, dim_head = 4, 16
    inner = heads * dim_head

    key = jax.random.PRNGKey(0)
    kx, kq, kw, kb = jax.random.split(key, 4)

    x = jax.random.normal(kx, (batch, seq, dim), dtype=jnp.float32)
    # Deterministic synthetic parameters (shapes from nn.Linear in __init__).
    w_qkv = jax.random.normal(kq, (dim, 3 * inner), dtype=jnp.float32) * (dim ** -0.5)
    w_out = jax.random.normal(kw, (inner, dim), dtype=jnp.float32) * (inner ** -0.5)
    b_out = jax.random.normal(kb, (1, dim), dtype=jnp.float32) * 0.01
    # TODO(synk): nn.Dropout(p=0.0) is the identity; no dropout mask is generated.

    out = self_attention(x, w_qkv, w_out, b_out, heads=heads, dim_head=dim_head)
    out = jax.block_until_ready(out)

    ref = _reference(x, w_qkv, w_out, b_out, heads=heads, dim_head=dim_head)
    # bf16 MXU operands + approx reciprocal -> compare with a loose tolerance.
    assert jnp.allclose(out, ref, atol=5e-2, rtol=5e-2), "mismatch vs JAX reference"

    print("KERNEL_OK")
</pallas_src>

<mosaic_0001>
module attributes {stable_mosaic.version = 11 : i64} {
  func.func @_self_attn_kernel(%arg0: i32, %arg1: i32, %arg2: memref<1x8x32xf32, #tpu.memory_space<vmem>>, %arg3: memref<1x32x16xbf16, #tpu.memory_space<vmem>>, %arg4: memref<1x32x16xbf16, #tpu.memory_space<vmem>>, %arg5: memref<1x32x16xbf16, #tpu.memory_space<vmem>>, %arg6: memref<1x16x32xbf16, #tpu.memory_space<vmem>>, %arg7: memref<1x32xf32, #tpu.memory_space<vmem>>, %arg8: memref<1x8x32xf32, #tpu.memory_space<vmem>>, %arg9: memref<8x32xf32, #tpu.memory_space<vmem>>) attributes {dimension_semantics = [#tpu.dimension_semantics<parallel>, #tpu.dimension_semantics<arbitrary>], iteration_bounds = array<i64: 2, 4>, scalar_prefetch = 0 : i64, scratch_operands = 1 : i64, tpu.core_type = #tpu.core_type<tc>, window_params = [{transform_indices = @transform_0, window_bounds = array<i64: 1, 8, 32>}, {transform_indices = @transform_1, window_bounds = array<i64: 1, 32, 16>}, {transform_indices = @transform_2, window_bounds = array<i64: 1, 32, 16>}, {transform_indices = @transform_3, window_bounds = array<i64: 1, 32, 16>}, {transform_indices = @transform_4, window_bounds = array<i64: 1, 16, 32>}, {pipeline_mode = #tpu.pipeline_mode<synchronous>, transform_indices = @transform_5, window_bounds = array<i64: 1, 32>}, {transform_indices = @transform_6, window_bounds = array<i64: 1, 8, 32>}]} {
    %c0_i32 = arith.constant 0 : i32
    %0 = arith.cmpi eq, %arg1, %c0_i32 : i32
    %1 = arith.extui %0 : i1 to i32
    %c0_i32_0 = arith.constant 0 : i32
    %2 = arith.cmpi ne, %1, %c0_i32_0 : i32
    scf.if %2 {
      %cst_27 = arith.constant 0.000000e+00 : f32
      %41 = vector.broadcast %cst_27 : f32 to vector<8x32xf32>
      %c0_28 = arith.constant 0 : index
      %c0_29 = arith.constant 0 : index
      %42 = vector.load %arg9[%c0_28, %c0_29] : memref<8x32xf32, #tpu.memory_space<vmem>>, vector<8x32xf32>
      tpu.vector_store %arg9[%c0_28, %c0_29], %41 {strides = array<i32>} : memref<8x32xf32, #tpu.memory_space<vmem>>, vector<8x32xf32>,
    } else {
    }
    %c0 = arith.constant 0 : index
    %c0_1 = arith.constant 0 : index
    %c0_2 = arith.constant 0 : index
    %3 = vector.load %arg2[%c0, %c0_1, %c0_2] : memref<1x8x32xf32, #tpu.memory_space<vmem>>, vector<1x8x32xf32>
    %4 = vector.shape_cast %3 : vector<1x8x32xf32> to vector<8x32xf32>
    %5 = arith.truncf %4 : vector<8x32xf32> to vector<8x32xbf16>
    %c0_3 = arith.constant 0 : index
    %c0_4 = arith.constant 0 : index
    %c0_5 = arith.constant 0 : index
    %6 = vector.load %arg3[%c0_3, %c0_4, %c0_5] : memref<1x32x16xbf16, #tpu.memory_space<vmem>>, vector<1x32x16xbf16>
    %7 = vector.shape_cast %6 : vector<1x32x16xbf16> to vector<32x16xbf16>
    %cst = arith.constant dense<0.000000e+00> : vector<8x16xf32>
    %8 = tpu.matmul %5, %7, %cst {dimension_numbers = #tpu.dot_dimension_numbers<[1], [0], [0], [1], [0, 0, 1, 1], [], []>} : vector<8x32xbf16>, vector<32x16xbf16>, vector<8x16xf32> -> vector<8x16xf32>
    %c0_6 = arith.constant 0 : index
    %c0_7 = arith.constant 0 : index
    %c0_8 = arith.constant 0 : index
    %9 = vector.load %arg4[%c0_6, %c0_7, %c0_8] : memref<1x32x16xbf16, #tpu.memory_space<vmem>>, vector<1x32x16xbf16>
    %10 = vector.shape_cast %9 : vector<1x32x16xbf16> to vector<32x16xbf16>
    %cst_9 = arith.constant dense<0.000000e+00> : vector<8x16xf32>
    %11 = tpu.matmul %5, %10, %cst_9 {dimension_numbers = #tpu.dot_dimension_numbers<[1], [0], [0], [1], [0, 0, 1, 1], [], []>} : vector<8x32xbf16>, vector<32x16xbf16>, vector<8x16xf32> -> vector<8x16xf32>
    %c0_10 = arith.constant 0 : index
    %c0_11 = arith.constant 0 : index
    %c0_12 = arith.constant 0 : index
    %12 = vector.load %arg5[%c0_10, %c0_11, %c0_12] : memref<1x32x16xbf16, #tpu.memory_space<vmem>>, vector<1x32x16xbf16>
    %13 = vector.shape_cast %12 : vector<1x32x16xbf16> to vector<32x16xbf16>
    %cst_13 = arith.constant dense<0.000000e+00> : vector<8x16xf32>
    %14 = tpu.matmul %5, %13, %cst_13 {dimension_numbers = #tpu.dot_dimension_numbers<[1], [0], [0], [1], [0, 0, 1, 1], [], []>} : vector<8x32xbf16>, vector<32x16xbf16>, vector<8x16xf32> -> vector<8x16xf32>
    %15 = arith.truncf %8 : vector<8x16xf32> to vector<8x16xbf16>
    %16 = arith.truncf %11 : vector<8x16xf32> to vector<8x16xbf16>
    %cst_14 = arith.constant dense<0.000000e+00> : vector<8x8xf32>
    %17 = tpu.matmul %15, %16, %cst_14 {dimension_numbers = #tpu.dot_dimension_numbers<[1], [1], [0], [0], [0, 0, 1, 0], [], []>} : vector<8x16xbf16>, vector<8x16xbf16>, vector<8x8xf32> -> vector<8x8xf32>
    %cst_15 = arith.constant dense<0xFF800000> : vector<8xf32>
    %18 = vector.multi_reduction <maximumf>, %17, %cst_15 [1] : vector<8x8xf32> to vector<8xf32>
    %19 = vector.shape_cast %18 : vector<8xf32> to vector<8x1xf32>
    %20 = vector.broadcast %19 : vector<8x1xf32> to vector<8x8xf32>
    %21 = arith.subf %17, %20 : vector<8x8xf32>
    %22 = math.exp %21 : vector<8x8xf32>
    %cst_16 = arith.constant dense<0.000000e+00> : vector<8xf32>
    %23 = vector.multi_reduction <add>, %22, %cst_16 [1] : vector<8x8xf32> to vector<8xf32>
    %24 = vector.shape_cast %23 : vector<8xf32> to vector<8x1xf32>
    %25 = tpu.reciprocal %24 {approx = true} : vector<8x1xf32> -> vector<8x1xf32>
    %26 = vector.broadcast %25 : vector<8x1xf32> to vector<8x8xf32>
    %27 = arith.mulf %22, %26 : vector<8x8xf32>
    %28 = arith.truncf %27 : vector<8x8xf32> to vector<8x8xbf16>
    %29 = arith.truncf %14 : vector<8x16xf32> to vector<8x16xbf16>
    %cst_17 = arith.constant dense<0.000000e+00> : vector<8x16xf32>
    %30 = tpu.matmul %28, %29, %cst_17 {dimension_numbers = #tpu.dot_dimension_numbers<[1], [0], [0], [1], [0, 0, 1, 1], [], []>} : vector<8x8xbf16>, vector<8x16xbf16>, vector<8x16xf32> -> vector<8x16xf32>
    %c0_18 = arith.constant 0 : index
    %c0_19 = arith.constant 0 : index
    %31 = vector.load %arg9[%c0_18, %c0_19] : memref<8x32xf32, #tpu.memory_space<vmem>>, vector<8x32xf32>
    %32 = arith.truncf %30 : vector<8x16xf32> to vector<8x16xbf16>
    %c0_20 = arith.constant 0 : index
    %c0_21 = arith.constant 0 : index
    %c0_22 = arith.constant 0 : index
    %33 = vector.load %arg6[%c0_20, %c0_21, %c0_22] : memref<1x16x32xbf16, #tpu.memory_space<vmem>>, vector<1x16x32xbf16>
    %34 = vector.shape_cast %33 : vector<1x16x32xbf16> to vector<16x32xbf16>
    %cst_23 = arith.constant dense<0.000000e+00> : vector<8x32xf32>
    %35 = tpu.matmul %32, %34, %cst_23 {dimension_numbers = #tpu.dot_dimension_numbers<[1], [0], [0], [1], [0, 0, 1, 1], [], []>} : vector<8x16xbf16>, vector<16x32xbf16>, vector<8x32xf32> -> vector<8x32xf32>
    %36 = arith.addf %31, %35 : vector<8x32xf32>
    %c0_24 = arith.constant 0 : index
    %c0_25 = arith.constant 0 : index
    %37 = vector.load %arg9[%c0_24, %c0_25] : memref<8x32xf32, #tpu.memory_space<vmem>>, vector<8x32xf32>
    tpu.vector_store %arg9[%c0_24, %c0_25], %36 {strides = array<i32>} : memref<8x32xf32, #tpu.memory_space<vmem>>, vector<8x32xf32>,
    %c3_i32 = arith.constant 3 : i32
    %38 = arith.cmpi eq, %arg1, %c3_i32 : i32
    %39 = arith.extui %38 : i1 to i32
    %c0_i32_26 = arith.constant 0 : i32
    %40 = arith.cmpi ne, %39, %c0_i32_26 : i32
    scf.if %40 {
      %c0_27 = arith.constant 0 : index
      %c0_28 = arith.constant 0 : index
      %41 = vector.load %arg9[%c0_27, %c0_28] : memref<8x32xf32, #tpu.memory_space<vmem>>, vector<8x32xf32>
      %c0_29 = arith.constant 0 : index
      %c0_30 = arith.constant 0 : index
      %42 = vector.load %arg7[%c0_29, %c0_30] : memref<1x32xf32, #tpu.memory_space<vmem>>, vector<1x32xf32>
      %43 = vector.broadcast %42 : vector<1x32xf32> to vector<8x32xf32>
      %44 = arith.addf %41, %43 : vector<8x32xf32>
      %c0_31 = arith.constant 0 : index
      %c0_32 = arith.constant 0 : index
      %c0_33 = arith.constant 0 : index
      %45 = vector.load %arg8[%c0_31, %c0_32, %c0_33] : memref<1x8x32xf32, #tpu.memory_space<vmem>>, vector<1x8x32xf32>
      %46 = vector.shape_cast %45 : vector<1x8x32xf32> to vector<8x32xf32>
      %47 = vector.shape_cast %44 : vector<8x32xf32> to vector<1x8x32xf32>
      tpu.vector_store %arg8[%c0_31, %c0_32, %c0_33], %47 {strides = array<i32>} : memref<1x8x32xf32, #tpu.memory_space<vmem>>, vector<1x8x32xf32>,
    } else {
    }
    return
  }
  func.func @transform_0(%arg0: i32, %arg1: i32) -> (i32, i32, i32) {
    %c0_i32 = arith.constant 0 : i32
    %c0_i32_0 = arith.constant 0 : i32
    %c0_i32_1 = arith.constant 0 : i32
    return %arg0, %c0_i32, %c0_i32_0 : i32, i32, i32
  }
  func.func @transform_1(%arg0: i32, %arg1: i32) -> (i32, i32, i32) {
    %c0_i32 = arith.constant 0 : i32
    %c0_i32_0 = arith.constant 0 : i32
    %c0_i32_1 = arith.constant 0 : i32
    return %arg1, %c0_i32, %c0_i32_0 : i32, i32, i32
  }
  func.func @transform_2(%arg0: i32, %arg1: i32) -> (i32, i32, i32) {
    %c0_i32 = arith.constant 0 : i32
    %c0_i32_0 = arith.constant 0 : i32
    %c0_i32_1 = arith.constant 0 : i32
    return %arg1, %c0_i32, %c0_i32_0 : i32, i32, i32
  }
  func.func @transform_3(%arg0: i32, %arg1: i32) -> (i32, i32, i32) {
    %c0_i32 = arith.constant 0 : i32
    %c0_i32_0 = arith.constant 0 : i32
    %c0_i32_1 = arith.constant 0 : i32
    return %arg1, %c0_i32, %c0_i32_0 : i32, i32, i32
  }
  func.func @transform_4(%arg0: i32, %arg1: i32) -> (i32, i32, i32) {
    %c0_i32 = arith.constant 0 : i32
    %c0_i32_0 = arith.constant 0 : i32
    %c0_i32_1 = arith.constant 0 : i32
    return %arg1, %c0_i32, %c0_i32_0 : i32, i32, i32
  }
  func.func @transform_5(%arg0: i32, %arg1: i32) -> (i32, i32) {
    %c0_i32 = arith.constant 0 : i32
    %c0_i32_0 = arith.constant 0 : i32
    %c0_i32_1 = arith.constant 0 : i32
    return %c0_i32, %c0_i32_0 : i32, i32
  }
  func.func @transform_6(%arg0: i32, %arg1: i32) -> (i32, i32, i32) {
    %c0_i32 = arith.constant 0 : i32
    %c0_i32_0 = arith.constant 0 : i32
    %c0_i32_1 = arith.constant 0 : i32
    return %arg0, %c0_i32, %c0_i32_0 : i32, i32, i32
  }
}

</mosaic_0001>

<llo_original>
// kernel: tpu_custom_call.1
$region0: #{tpu_custom_call.1}
  #allocation0 [shape = 'u32[]', space=smem, size = 0x4, offset = 0x4, fixed_abs, tag = 'smem constant byte address 0x4 - core index']
  #allocation1 [shape = 'u32[144,128]{1,0:T(1,128)}', space=vmem, size = 0x12000, scoped, tag = 'internal scratch']
  #allocation2 [shape = 'f32[8,32]{1,0:T(8,128)}', space=vmem, size = 0x1000, scoped, tag = 'scratch operand']
  %s0 = inlined_call_operand.vmem [shape: f32[2,8,32], index: 0, kind: input, shape index: {}]
  %s1 = inlined_call_operand.vmem [shape: bf16[4,32,16], index: 1, kind: input, shape index: {}]
  %s2 = inlined_call_operand.vmem [shape: bf16[4,32,16], index: 2, kind: input, shape index: {}]
  %s3 = inlined_call_operand.vmem [shape: bf16[4,32,16], index: 3, kind: input, shape index: {}]
  %s4 = inlined_call_operand.vmem [shape: bf16[4,16,32], index: 4, kind: input, shape index: {}]
  %s5 = inlined_call_operand.vmem [shape: f32[1,32], index: 5, kind: input, shape index: {}]
  %s6 = inlined_call_operand.hbm [shape: f32[2,8,32], index: 6, kind: output, shape index: {}]
  %s7 = sld [smem:[#allocation0]]
  $region65: #{tpu_custom_call.1} parent=0
    _
  %s9 = ssub.s32 1, %s7
  %s10 = scalar_select 0, %s9, %s7
  $region1: #{tpu_custom_call.1} parent=0
    #allocation3 [shape = 'u8[8192]{0}', space=vmem, size = 0x2000, scoped, tag = 'output window, operand 0']
    #allocation4 [shape = 's32[2]{0}', space=sflag, size = 0x8, scoped, tag = 'scoped memory for tpu_custom_call.1']
    %11 = vsyncpa [#allocation4], 0
    %s12 = scalar_lea.sflag [#allocation4], 1
    %13 = vsyncpa %s12, 0
    loop: start=0, step=1, limit=10
    $region2: #{tpu_custom_call.1} parent=1 // loop_pre_header
      _
    $region3: #{tpu_custom_call.1} parent=1 // loop_header
      %s15 = sphi 0, %s19
      %p16 = scmp.ge.s32.totalorder %s15, 10
      %s22 = sphi 0, %s34
      %s23 = sphi 0, %s30
      %s24 = sphi 0, %s22
      %s25 = sphi 0, %s23
      %s26 = sphi 0, %s24
      %s27 = sphi 0, %s25
      %s37 = sphi 0, %s39
      %s40 = sphi 0, %s37
      %s41 = sphi 0, %s40
      %s57 = sphi 0, %s41
      %s63 = sphi 0, %s65
      %s66 = sphi 0, %s63
      %s67 = sphi 0, %s66
      %s83 = sphi 0, %s67
      %s89 = sphi 0, %s91
      %s92 = sphi 0, %s89
      %s93 = sphi 0, %s92
      %s109 = sphi 0, %s93
      %s115 = sphi 0, %s117
      %s118 = sphi 0, %s115
      %s119 = sphi 0, %s118
      %s135 = sphi 0, %s119
      %s141 = sphi 0, %s143
      %s144 = sphi 0, %s141
      %s145 = sphi 0, %s144
      %s161 = sphi 0, %s145
      %s165 = sphi 0, %s165
      %s167 = sphi 0, %s165
      %s168 = sphi 0, %s167
      %s182 = sphi 0, %s168
      %s188 = sphi 0, %s190
      %s191 = sphi 0, %s188
      %s192 = sphi 0, %s191
      %s208 = sphi 0, %s192
    $region4: #{tpu_custom_call.1} parent=1 // loop_header_branch
      %18 = sbr.rel (%p16) target = $region8
    $region5: #{tpu_custom_call.1} parent=1 // loop_body
      %s20 = ssub.s32 %s15, 1
      %s21 = ssub.s32 %s15, 2
      %s28 = sadd.s32 1, %s23
      %p29 = scmp.ge.s32.totalorder %s28, 4
      %s30 = scalar_select %p29, 0, %s28
      %s31 = sadd.s32 1, %s22
      %s32 = scalar_select %p29, %s31, %s22
      %p33 = scmp.ge.s32.totalorder %s32, 2
      %s34 = scalar_select %p33, 0, %s32
      %s35 = ssub.s32 %s22, %s34
      %p36 = scmp.eq.s32.totalorder %s35, 0
      %s38 = sadd.s32 %s37, 1
      %s39 = scalar_select %p36, %s37, %s38
      %p42 = pneg %p36
      %p43 = scmp.eq.s32.totalorder %s15, 7
      %p44 = por %p42, %p43
      %p45 = scmp.ne.s32.totalorder %s37, %s40
      %p46 = scmp.eq.s32.totalorder %s15, 0
      %p47 = por %p45, %p46
      %p48 = scmp.ne.s32.totalorder %s37, %s40
      %p49 = scmp.eq.s32.totalorder %s20, 7
      %p50 = por %p48, %p49
      %p51 = scmp.ne.s32.totalorder %s40, %s41
      %p52 = scmp.eq.s32.totalorder %s20, 0
      %p53 = por %p51, %p52
      %p54 = scmp.ne.s32.totalorder %s40, %s41
      %p55 = scmp.eq.s32.totalorder %s21, 7
      %p56 = por %p54, %p55
      %p58 = scmp.ne.s32.totalorder %s41, %s57
      %p59 = scmp.eq.s32.totalorder %s21, 0
      %p60 = por %p58, %p59
      %s61 = ssub.s32 %s23, %s30
      %p62 = scmp.eq.s32.totalorder %s61, 0
      %s64 = sadd.s32 %s63, 1
      %s65 = scalar_select %p62, %s63, %s64
      %p68 = pneg %p62
      %p69 = scmp.eq.s32.totalorder %s15, 7
      %p70 = por %p68, %p69
      %p71 = scmp.ne.s32.totalorder %s63, %s66
      %p72 = scmp.eq.s32.totalorder %s15, 0
      %p73 = por %p71, %p72
      %p74 = scmp.ne.s32.totalorder %s63, %s66
      %p75 = scmp.eq.s32.totalorder %s20, 7
      %p76 = por %p74, %p75
      %p77 = scmp.ne.s32.totalorder %s66, %s67
      %p78 = scmp.eq.s32.totalorder %s20, 0
      %p79 = por %p77, %p78
      %p80 = scmp.ne.s32.totalorder %s66, %s67
      %p81 = scmp.eq.s32.totalorder %s21, 7
      %p82 = por %p80, %p81
      %p84 = scmp.ne.s32.totalorder %s67, %s83
      %p85 = scmp.eq.s32.totalorder %s21, 0
      %p86 = por %p84, %p85
      %s87 = ssub.s32 %s23, %s30
      %p88 = scmp.eq.s32.totalorder %s87, 0
      %s90 = sadd.s32 %s89, 1
      %s91 = scalar_select %p88, %s89, %s90
      %p94 = pneg %p88
      %p95 = scmp.eq.s32.totalorder %s15, 7
      %p96 = por %p94, %p95
      %p97 = scmp.ne.s32.totalorder %s89, %s92
      %p98 = scmp.eq.s32.totalorder %s15, 0
      %p99 = por %p97, %p98
      %p100 = scmp.ne.s32.totalorder %s89, %s92
      %p101 = scmp.eq.s32.totalorder %s20, 7
      %p102 = por %p100, %p101
      %p103 = scmp.ne.s32.totalorder %s92, %s93
      %p104 = scmp.eq.s32.totalorder %s20, 0
      %p105 = por %p103, %p104
      %p106 = scmp.ne.s32.totalorder %s92, %s93
      %p107 = scmp.eq.s32.totalorder %s21, 7
      %p108 = por %p106, %p107
      %p110 = scmp.ne.s32.totalorder %s93, %s109
      %p111 = scmp.eq.s32.totalorder %s21, 0
      %p112 = por %p110, %p111
      %s113 = ssub.s32 %s23, %s30
      %p114 = scmp.eq.s32.totalorder %s113, 0
      %s116 = sadd.s32 %s115, 1
      %s117 = scalar_select %p114, %s115, %s116
      %p120 = pneg %p114
      %p121 = scmp.eq.s32.totalorder %s15, 7
      %p122 = por %p120, %p121
      %p123 = scmp.ne.s32.totalorder %s115, %s118
      %p124 = scmp.eq.s32.totalorder %s15, 0
      %p125 = por %p123, %p124
      %p126 = scmp.ne.s32.totalorder %s115, %s118
      %p127 = scmp.eq.s32.totalorder %s20, 7
      %p128 = por %p126, %p127
      %p129 = scmp.ne.s32.totalorder %s118, %s119
      %p130 = scmp.eq.s32.totalorder %s20, 0
      %p131 = por %p129, %p130
      %p132 = scmp.ne.s32.totalorder %s118, %s119
      %p133 = scmp.eq.s32.totalorder %s21, 7
      %p134 = por %p132, %p133
      %p136 = scmp.ne.s32.totalorder %s119, %s135
      %p137 = scmp.eq.s32.totalorder %s21, 0
      %p138 = por %p136, %p137
      %s139 = ssub.s32 %s23, %s30
      %p140 = scmp.eq.s32.totalorder %s139, 0
      %s142 = sadd.s32 %s141, 1
      %s143 = scalar_select %p140, %s141, %s142
      %p146 = pneg %p140
      %p147 = scmp.eq.s32.totalorder %s15, 7
      %p148 = por %p146, %p147
      %p149 = scmp.ne.s32.totalorder %s141, %s144
      %p150 = scmp.eq.s32.totalorder %s15, 0
      %p151 = por %p149, %p150
      %p152 = scmp.ne.s32.totalorder %s141, %s144
      %p153 = scmp.eq.s32.totalorder %s20, 7
      %p154 = por %p152, %p153
      %p155 = scmp.ne.s32.totalorder %s144, %s145
      %p156 = scmp.eq.s32.totalorder %s20, 0
      %p157 = por %p155, %p156
      %p158 = scmp.ne.s32.totalorder %s144, %s145
      %p159 = scmp.eq.s32.totalorder %s21, 7
      %p160 = por %p158, %p159
      %p162 = scmp.ne.s32.totalorder %s145, %s161
      %p163 = scmp.eq.s32.totalorder %s21, 0
      %p164 = por %p162, %p163
      %s166 = sadd.s32 %s165, 1
      %p169 = scmp.eq.s32.totalorder %s15, 7
      %p170 = scmp.ne.s32.totalorder %s165, %s167
      %p171 = scmp.eq.s32.totalorder %s15, 0
      %p172 = por %p170, %p171
      %p173 = scmp.ne.s32.totalorder %s165, %s167
      %p174 = scmp.eq.s32.totalorder %s20, 7
      %p175 = por %p173, %p174
      %p176 = scmp.ne.s32.totalorder %s167, %s168
      %p177 = scmp.eq.s32.totalorder %s20, 0
      %p178 = por %p176, %p177
      %p179 = scmp.ne.s32.totalorder %s167, %s168
      %p180 = scmp.eq.s32.totalorder %s21, 7
      %p181 = por %p179, %p180
      %p183 = scmp.ne.s32.totalorder %s168, %s182
      %p184 = scmp.eq.s32.totalorder %s21, 0
      %p185 = por %p183, %p184
      %s186 = ssub.s32 %s22, %s34
      %p187 = scmp.eq.s32.totalorder %s186, 0
      %s189 = sadd.s32 %s188, 1
      %s190 = scalar_select %p187, %s188, %s189
      %p193 = pneg %p187
      %p194 = scmp.eq.s32.totalorder %s15, 7
      %p195 = por %p193, %p194
      %p196 = scmp.ne.s32.totalorder %s188, %s191
      %p197 = scmp.eq.s32.totalorder %s15, 0
      %p198 = por %p196, %p197
      %p199 = scmp.ne.s32.totalorder %s188, %s191
      %p200 = scmp.eq.s32.totalorder %s20, 7
      %p201 = por %p199, %p200
      %p202 = scmp.ne.s32.totalorder %s191, %s192
      %p203 = scmp.eq.s32.totalorder %s20, 0
      %p204 = por %p202, %p203
      %p205 = scmp.ne.s32.totalorder %s191, %s192
      %p206 = scmp.eq.s32.totalorder %s21, 7
      %p207 = por %p205, %p206
      %p209 = scmp.ne.s32.totalorder %s192, %s208
      %p210 = scmp.eq.s32.totalorder %s21, 0
      %p211 = por %p209, %p210
      %p212 = scmp.le.s32.totalorder 1, %s15
      %p213 = scmp.lt.s32.totalorder %s15, 9
      %p214 = pnand %p212, %p213
      %p215 = pneg %p214
      // Predicated region
      $region9: #{tpu_custom_call.1} parent=5 // pred_check
        _
      $region10: #{tpu_custom_call.1} parent=5 // pred_check_branch
        %217 = sbr.rel (%p214) target = $region12
      $region11: #{tpu_custom_call.1} parent=5 // pred_region
        %s218 = ssub.s32 %s15, 1
        // Predicated region
        $region13: #{tpu_custom_call.1} parent=11 // pred_check
          %p219 = pneg %p178
        $region14: #{tpu_custom_call.1} parent=11 // pred_check_branch
          %221 = sbr.rel (%p219) target = $region16
        $region15: #{tpu_custom_call.1} parent=11 // pred_region
          _
        $region16: #{tpu_custom_call.1} parent=11 // pred_fallthru
          _
      $region12: #{tpu_custom_call.1} parent=5 // pred_fallthru
        _
      %p222 = scmp.lt.s32.totalorder %s15, 8
      // Predicated region
      $region17: #{tpu_custom_call.1} parent=5 // pred_check
        %p223 = pneg %p222
      $region18: #{tpu_custom_call.1} parent=5 // pred_check_branch
        %225 = sbr.rel (%p223) target = $region20
      $region19: #{tpu_custom_call.1} parent=5 // pred_region
        // Predicated region
        $region21: #{tpu_custom_call.1} parent=19 // pred_check
          %p226 = pneg %p47
        $region22: #{tpu_custom_call.1} parent=19 // pred_check_branch
          %228 = sbr.rel (%p226) target = $region24
        $region23: #{tpu_custom_call.1} parent=19 // pred_region
          %p229 = scmp.lt.s32.totalorder %s22, 1
          %s230 = scalar_select %p229, %s22, 1
          %s231 = smul.addr %s230, 8
          %s232 = scalar_lea.vmem %s0, %s231
        $region24: #{tpu_custom_call.1} parent=19 // pred_fallthru
          _
        // Predicated region
        $region25: #{tpu_custom_call.1} parent=19 // pred_check
          %p233 = pneg %p73
        $region26: #{tpu_custom_call.1} parent=19 // pred_check_branch
          %235 = sbr.rel (%p233) target = $region28
        $region27: #{tpu_custom_call.1} parent=19 // pred_region
          %p236 = scmp.lt.s32.totalorder %s23, 3
          %s237 = scalar_select %p236, %s23, 3
          %s238 = smul.addr %s237, 4
          %s239 = smul.addr %s238, 4
          %s240 = scalar_lea.vmem %s1, %s239
        $region28: #{tpu_custom_call.1} parent=19 // pred_fallthru
          _
        // Predicated region
        $region29: #{tpu_custom_call.1} parent=19 // pred_check
          %p241 = pneg %p99
        $region30: #{tpu_custom_call.1} parent=19 // pred_check_branch
          %243 = sbr.rel (%p241) target = $region32
        $region31: #{tpu_custom_call.1} parent=19 // pred_region
          %p244 = scmp.lt.s32.totalorder %s23, 3
          %s245 = scalar_select %p244, %s23, 3
          %s246 = smul.addr %s245, 4
          %s247 = smul.addr %s246, 4
          %s248 = scalar_lea.vmem %s2, %s247
        $region32: #{tpu_custom_call.1} parent=19 // pred_fallthru
          _
        // Predicated region
        $region33: #{tpu_custom_call.1} parent=19 // pred_check
          %p249 = pneg %p125
        $region34: #{tpu_custom_call.1} parent=19 // pred_check_branch
          %251 = sbr.rel (%p249) target = $region36
        $region35: #{tpu_custom_call.1} parent=19 // pred_region
          %p252 = scmp.lt.s32.totalorder %s23, 3
          %s253 = scalar_select %p252, %s23, 3
          %s254 = smul.addr %s253, 4
          %s255 = smul.addr %s254, 4
          %s256 = scalar_lea.vmem %s3, %s255
        $region36: #{tpu_custom_call.1} parent=19 // pred_fallthru
          _
        // Predicated region
        $region37: #{tpu_custom_call.1} parent=19 // pred_check
          %p257 = pneg %p151
        $region38: #{tpu_custom_call.1} parent=19 // pred_check_branch
          %259 = sbr.rel (%p257) target = $region40
        $region39: #{tpu_custom_call.1} parent=19 // pred_region
          %p260 = scmp.lt.s32.totalorder %s23, 3
          %s261 = scalar_select %p260, %s23, 3
          %s262 = smul.addr %s261, 2
          %s263 = smul.addr %s262, 4
          %s264 = scalar_lea.vmem %s4, %s263
        $region40: #{tpu_custom_call.1} parent=19 // pred_fallthru
          _
      $region20: #{tpu_custom_call.1} parent=5 // pred_fallthru
        _
      %p265 = scmp.le.s32.totalorder 1, %s15
      %p266 = scmp.lt.s32.totalorder %s15, 9
      %p267 = pnand %p265, %p266
      %p268 = pneg %p267
      // Predicated region
      $region41: #{tpu_custom_call.1} parent=5 // pred_check
        _
      $region42: #{tpu_custom_call.1} parent=5 // pred_check_branch
        %270 = sbr.rel (%p267) target = $region44
      $region43: #{tpu_custom_call.1} parent=5 // pred_region
        %s271 = ssub.s32 %s15, 1
        %p272 = scmp.lt.s32.totalorder %s24, 1
        %s273 = scalar_select %p272, %s24, 1
        %s274 = smul.addr %s273, 8
        %s275 = scalar_lea.vmem %s0, %s274
        %p276 = pneg %p53
        %p277 = pneg %p50
        %p278 = scmp.lt.s32.totalorder %s25, 3
        %s279 = scalar_select %p278, %s25, 3
        %s280 = smul.addr %s279, 4
        %s281 = smul.addr %s280, 4
        %s282 = scalar_lea.vmem %s1, %s281
        %p283 = pneg %p79
        %p284 = pneg %p76
        %p285 = scmp.lt.s32.totalorder %s25, 3
        %s286 = scalar_select %p285, %s25, 3
        %s287 = smul.addr %s286, 4
        %s288 = smul.addr %s287, 4
        %s289 = scalar_lea.vmem %s2, %s288
        %p290 = pneg %p105
        %p291 = pneg %p102
        %p292 = scmp.lt.s32.totalorder %s25, 3
        %s293 = scalar_select %p292, %s25, 3
        %s294 = smul.addr %s293, 4
        %s295 = smul.addr %s294, 4
        %s296 = scalar_lea.vmem %s3, %s295
        %p297 = pneg %p131
        %p298 = pneg %p128
        %p299 = scmp.lt.s32.totalorder %s25, 3
        %s300 = scalar_select %p299, %s25, 3
        %s301 = smul.addr %s300, 2
        %s302 = smul.addr %s301, 4
        %s303 = scalar_lea.vmem %s4, %s302
        %p304 = pneg %p157
        %p305 = pneg %p154
        %p306 = pneg %p178
        %p307 = pneg %p175
        %p308 = pneg %p204
        %p309 = pneg %p201
        %s310 = sand.u32 %s191, 1
        %s311 = scalar_lea.sflag [#allocation4], %s310
        %s312 = sand.u32 %s191, 1
        %s313 = smul.addr %s312, 8
        %s314 = scalar_lea.vmem [#allocation3], %s313
        %p315 = scmp.lt.s32.totalorder %s24, 1
        %s316 = scalar_select %p315, %s24, 1
        %s317 = smul.addr %s316, 8
        %s318 = scalar_lea.vmem %s0, %s317
        %p319 = scmp.lt.s32.totalorder %s25, 3
        %s320 = scalar_select %p319, %s25, 3
        %s321 = smul.addr %s320, 4
        %s322 = smul.addr %s321, 4
        %s323 = scalar_lea.vmem %s1, %s322
        %p324 = scmp.lt.s32.totalorder %s25, 3
        %s325 = scalar_select %p324, %s25, 3
        %s326 = smul.addr %s325, 4
        %s327 = smul.addr %s326, 4
        %s328 = scalar_lea.vmem %s2, %s327
        %p329 = scmp.lt.s32.totalorder %s25, 3
        %s330 = scalar_select %p329, %s25, 3
        %s331 = smul.addr %s330, 4
        %s332 = smul.addr %s331, 4
        %s333 = scalar_lea.vmem %s3, %s332
        %p334 = scmp.lt.s32.totalorder %s25, 3
        %s335 = scalar_select %p334, %s25, 3
        %s336 = smul.addr %s335, 2
        %s337 = smul.addr %s336, 4
        %s338 = scalar_lea.vmem %s4, %s337
        %p340 = scmp.eq.s32.totalorder %s25, 0
        // Predicated region
        $region45: #{tpu_custom_call.1} parent=43 // pred_check
          %p341 = pneg %p340
        $region46: #{tpu_custom_call.1} parent=43 // pred_check_branch
          %343 = sbr.rel (%p341) target = $region48
        $region47: #{tpu_custom_call.1} parent=43 // pred_region
          %vm344 = vcmask 261120
          %345 = vst.msk [vmem:[#allocation2] sm:$0xff] %vm344, 0.0
        $region48: #{tpu_custom_call.1} parent=43 // pred_fallthru
          _
        %v346 = vld [vmem:[%s318] sm:$0xff]
        %v347 = vpack.c.bf16 %v346, %v346
        %v348 = vld [vmem:[%s323] sm:$0xf]
        %v349 = vld [vmem:[%s323 + $0x4] sm:$0xf]
        %v350 = vld [vmem:[%s323 + $0x8] sm:$0xf]
        %v351 = vld [vmem:[%s323 + $0xc] sm:$0xf]
        %v356 = vunpack.c.l.b16 %v348
        %v357 = vunpack.c.l.b16 %v349
        %v358 = vunpack.c.l.b16 %v350
        %v359 = vunpack.c.l.b16 %v351
        %v360 = vpack.c.b16 %v357, %v356
        %v361 = vpack.c.b16 %v359, %v358
        %vm364 = vcmask 261120
        %v366 = vsel %vm364, %v347, 0
        %368 = vmatprep.subr.bf16.mxu0 0
        %369 = vmatpush1.bf16.msra.mxu0 %v360
        %370 = vmatprep.subr.bf16.mxu0 0
        %371 = vmatpush1.bf16.msra.mxu0 %v361
        %372 = vmatprep.subr.bf16.mxu0 0
        %373 = vmatpush1.bf16.msra.mxu0 0
        %374 = vmatprep.subr.bf16.mxu0 0
        %375 = vmatpush1.bf16.msra.mxu0 0
        %376 = vmatprep.subr.bf16.mxu0 0
        %377 = vmatpush1.bf16.msra.mxu0 0
        %378 = vmatprep.subr.bf16.mxu0 0
        %379 = vmatpush1.bf16.msra.mxu0 0
        %380 = vmatprep.subr.bf16.mxu0 0
        %381 = vmatpush1.bf16.msra.mxu0 0
        %382 = vmatprep.subr.bf16.mxu0 0
        %383 = vmatpush1.bf16.msra.mxu0 0
        %384 = vmatprep.subr.bf16.mxu0 0
        %385 = vmatpush1.bf16.msra.mxu0 0
        %386 = vmatprep.subr.bf16.mxu0 0
        %387 = vmatpush1.bf16.msra.mxu0 0
        %388 = vmatprep.subr.bf16.mxu0 0
        %389 = vmatpush1.bf16.msra.mxu0 0
        %390 = vmatprep.subr.bf16.mxu0 0
        %391 = vmatpush1.bf16.msra.mxu0 0
        %392 = vmatprep.subr.bf16.mxu0 0
        %393 = vmatpush1.bf16.msra.mxu0 0
        %394 = vmatprep.subr.bf16.mxu0 0
        %395 = vmatpush1.bf16.msra.mxu0 0
        %396 = vmatprep.subr.bf16.mxu0 0
        %397 = vmatpush1.bf16.msra.mxu0 0
        %398 = vmatprep.subr.bf16.mxu0 0
        %399 = vmatpush1.bf16.msra.mxu0 0
        %400 = vmatprep.mubr.bf16.mxu0 0
        %401 = vmatmul.mubr.bf16.gmra.mrb[0].mxu0 %v366
        %v402 = vpop.f32.mrb[0].mxu0
        %v403 = vadd.f32 0.0, %v402
        %v404 = vpop.f32.mrb[0].mxu0
        %v405 = vpop.f32.mrb[0].mxu0
        %v406 = vpop.f32.mrb[0].mxu0
        %407 = vdwg.mxu0
        %v408 = vld [vmem:[%s328] sm:$0xf]
        %v409 = vld [vmem:[%s328 + $0x4] sm:$0xf]
        %v410 = vld [vmem:[%s328 + $0x8] sm:$0xf]
        %v411 = vld [vmem:[%s328 + $0xc] sm:$0xf]
        %v416 = vunpack.c.l.b16 %v408
        %v417 = vunpack.c.l.b16 %v409
        %v418 = vunpack.c.l.b16 %v410
        %v419 = vunpack.c.l.b16 %v411
        %v420 = vpack.c.b16 %v417, %v416
        %v421 = vpack.c.b16 %v419, %v418
        %424 = vmatprep.subr.bf16.mxu0 0
        %425 = vmatpush1.bf16.msra.mxu0 %v420
        %426 = vmatprep.subr.bf16.mxu0 0
        %427 = vmatpush1.bf16.msra.mxu0 %v421
        %428 = vmatprep.subr.bf16.mxu0 0
        %429 = vmatpush1.bf16.msra.mxu0 0
        %430 = vmatprep.subr.bf16.mxu0 0
        %431 = vmatpush1.bf16.msra.mxu0 0
        %432 = vmatprep.subr.bf16.mxu0 0
        %433 = vmatpush1.bf16.msra.mxu0 0
        %434 = vmatprep.subr.bf16.mxu0 0
        %435 = vmatpush1.bf16.msra.mxu0 0
        %436 = vmatprep.subr.bf16.mxu0 0
        %437 = vmatpush1.bf16.msra.mxu0 0
        %438 = vmatprep.subr.bf16.mxu0 0
        %439 = vmatpush1.bf16.msra.mxu0 0
        %440 = vmatprep.subr.bf16.mxu0 0
        %441 = vmatpush1.bf16.msra.mxu0 0
        %442 = vmatprep.subr.bf16.mxu0 0
        %443 = vmatpush1.bf16.msra.mxu0 0
        %444 = vmatprep.subr.bf16.mxu0 0
        %445 = vmatpush1.bf16.msra.mxu0 0
        %446 = vmatprep.subr.bf16.mxu0 0
        %447 = vmatpush1.bf16.msra.mxu0 0
        %448 = vmatprep.subr.bf16.mxu0 0
        %449 = vmatpush1.bf16.msra.mxu0 0
        %450 = vmatprep.subr.bf16.mxu0 0
        %451 = vmatpush1.bf16.msra.mxu0 0
        %452 = vmatprep.subr.bf16.mxu0 0
        %453 = vmatpush1.bf16.msra.mxu0 0
        %454 = vmatprep.subr.bf16.mxu0 0
        %455 = vmatpush1.bf16.msra.mxu0 0
        %456 = vmatprep.mubr.bf16.mxu0 0
        %457 = vmatmul.mubr.bf16.gmra.mrb[0].mxu0 %v366
        %v458 = vpop.f32.mrb[0].mxu0
        %v459 = vadd.f32 0.0, %v458
        %v460 = vpop.f32.mrb[0].mxu0
        %v461 = vpop.f32.mrb[0].mxu0
        %v462 = vpop.f32.mrb[0].mxu0
        %463 = vdwg.mxu0
        %v464 = vld [vmem:[%s333] sm:$0xf]
        %v465 = vld [vmem:[%s333 + $0x4] sm:$0xf]
        %v466 = vld [vmem:[%s333 + $0x8] sm:$0xf]
        %v467 = vld [vmem:[%s333 + $0xc] sm:$0xf]
        %v472 = vunpack.c.l.b16 %v464
        %v473 = vunpack.c.l.b16 %v465
        %v474 = vunpack.c.l.b16 %v466
        %v475 = vunpack.c.l.b16 %v467
        %v476 = vpack.c.b16 %v473, %v472
        %v477 = vpack.c.b16 %v475, %v474
        %480 = vmatprep.subr.bf16.mxu0 0
        %481 = vmatpush1.bf16.msra.mxu0 %v476
        %482 = vmatprep.subr.bf16.mxu0 0
        %483 = vmatpush1.bf16.msra.mxu0 %v477
        %484 = vmatprep.subr.bf16.mxu0 0
        %485 = vmatpush1.bf16.msra.mxu0 0
        %486 = vmatprep.subr.bf16.mxu0 0
        %487 = vmatpush1.bf16.msra.mxu0 0
        %488 = vmatprep.subr.bf16.mxu0 0
        %489 = vmatpush1.bf16.msra.mxu0 0
        %490 = vmatprep.subr.bf16.mxu0 0
        %491 = vmatpush1.bf16.msra.mxu0 0
        %492 = vmatprep.subr.bf16.mxu0 0
        %493 = vmatpush1.bf16.msra.mxu0 0
        %494 = vmatprep.subr.bf16.mxu0 0
        %495 = vmatpush1.bf16.msra.mxu0 0
        %496 = vmatprep.subr.bf16.mxu0 0
        %497 = vmatpush1.bf16.msra.mxu0 0
        %498 = vmatprep.subr.bf16.mxu0 0
        %499 = vmatpush1.bf16.msra.mxu0 0
        %500 = vmatprep.subr.bf16.mxu0 0
        %501 = vmatpush1.bf16.msra.mxu0 0
        %502 = vmatprep.subr.bf16.mxu0 0
        %503 = vmatpush1.bf16.msra.mxu0 0
        %504 = vmatprep.subr.bf16.mxu0 0
        %505 = vmatpush1.bf16.msra.mxu0 0
        %506 = vmatprep.subr.bf16.mxu0 0
        %507 = vmatpush1.bf16.msra.mxu0 0
        %508 = vmatprep.subr.bf16.mxu0 0
        %509 = vmatpush1.bf16.msra.mxu0 0
        %510 = vmatprep.subr.bf16.mxu0 0
        %511 = vmatpush1.bf16.msra.mxu0 0
        %512 = vmatprep.mubr.bf16.mxu0 0
        %513 = vmatmul.mubr.bf16.gmra.mrb[0].mxu0 %v366
        %v514 = vpop.f32.mrb[0].mxu0
        %v515 = vadd.f32 0.0, %v514
        %v516 = vpop.f32.mrb[0].mxu0
        %v517 = vpop.f32.mrb[0].mxu0
        %v518 = vpop.f32.mrb[0].mxu0
        %519 = vdwg.mxu0
        %v520 = vpack.c.bf16 %v403, %v403
        %v521 = vpack.c.bf16 %v459, %v459
        %vm522 = vcmask 130048
        %v524 = vsel %vm522, %v520, 0
        %v527 = vsel %vm522, %v521, 0
        %529 = vmatprep.subr.bf16.mxu0 0
        %530 = vmatpush1.bf16.xpose.msra.mxu0 %v527
        %531 = vmatprep.subr.bf16.mxu0 0
        %532 = vmatpush1.bf16.xpose.msra.mxu0 0
        %533 = vmatprep.subr.bf16.mxu0 0
        %534 = vmatpush1.bf16.xpose.msra.mxu0 0
        %535 = vmatprep.subr.bf16.mxu0 0
        %536 = vmatpush1.bf16.xpose.msra.mxu0 0
        %537 = vmatprep.subr.bf16.mxu0 0
        %538 = vmatpush1.bf16.xpose.msra.mxu0 0
        %539 = vmatprep.subr.bf16.mxu0 0
        %540 = vmatpush1.bf16.xpose.msra.mxu0 0
        %541 = vmatprep.subr.bf16.mxu0 0
        %542 = vmatpush1.bf16.xpose.msra.mxu0 0
        %543 = vmatprep.subr.bf16.mxu0 0
        %544 = vmatpush1.bf16.xpose.msra.mxu0 0
        %545 = vmatprep.subr.bf16.mxu0 0
        %546 = vmatpush1.bf16.xpose.msra.mxu0 0
        %547 = vmatprep.subr.bf16.mxu0 0
        %548 = vmatpush1.bf16.xpose.msra.mxu0 0
        %549 = vmatprep.subr.bf16.mxu0 0
        %550 = vmatpush1.bf16.xpose.msra.mxu0 0
        %551 = vmatprep.subr.bf16.mxu0 0
        %552 = vmatpush1.bf16.xpose.msra.mxu0 0
        %553 = vmatprep.subr.bf16.mxu0 0
        %554 = vmatpush1.bf16.xpose.msra.mxu0 0
        %555 = vmatprep.subr.bf16.mxu0 0
        %556 = vmatpush1.bf16.xpose.msra.mxu0 0
        %557 = vmatprep.subr.bf16.mxu0 0
        %558 = vmatpush1.bf16.xpose.msra.mxu0 0
        %559 = vmatprep.subr.bf16.mxu0 0
        %560 = vmatpush1.bf16.xpose.msra.mxu0 0
        %561 = vmatprep.mubr.bf16.mxu0 0
        %562 = vmatmul.mubr.bf16.gmra.mrb[0].mxu0 %v524
        %v563 = vpop.f32.mrb[0].mxu0
        %v564 = vadd.f32 0.0, %v563
        %v565 = vpop.f32.mrb[0].mxu0
        %v566 = vpop.f32.mrb[0].mxu0
        %v567 = vpop.f32.mrb[0].mxu0
        %568 = vdwg.mxu0
        %vm569 = vcmask 64512
        %v570 = vsel %vm569, %v564, -inf
        %571 = vmax.xlane.f32.xlu0 %v570
        %v572 = vpop.xlane.xlu0 %571
        %v573 = vsub.f32 %v564, %v572
        %v574 = vmul.f32 %v573, 1.442695
        %v575 = vpow.pop %v574
        %v576 = vsel %vm569, %v575, 0.0
        %577 = vadd.xlane.f32.xlu0 %v576
        %v578 = vpop.xlane.xlu0 %577
        %v579 = vrcp.pop %v578
        %v580 = vmul.f32 %v575, %v579
        %v581 = vpack.c.bf16 %v580, %v580
        %v582 = vpack.c.bf16 %v515, %v515
        %v584 = vsel %vm569, %v581, 0
        %vm586 = vcmask 1043456
        %v588 = vsel %vm586, %v582, 0
        %590 = vmatprep.subr.bf16.mxu0 0
        %591 = vmatpush1.bf16.msra.mxu0 %v588
        %592 = vmatprep.subr.bf16.mxu0 0
        %593 = vmatpush1.bf16.msra.mxu0 0
        %594 = vmatprep.subr.bf16.mxu0 0
        %595 = vmatpush1.bf16.msra.mxu0 0
        %596 = vmatprep.subr.bf16.mxu0 0
        %597 = vmatpush1.bf16.msra.mxu0 0
        %598 = vmatprep.subr.bf16.mxu0 0
        %599 = vmatpush1.bf16.msra.mxu0 0
        %600 = vmatprep.subr.bf16.mxu0 0
        %601 = vmatpush1.bf16.msra.mxu0 0
        %602 = vmatprep.subr.bf16.mxu0 0
        %603 = vmatpush1.bf16.msra.mxu0 0
        %604 = vmatprep.subr.bf16.mxu0 0
        %605 = vmatpush1.bf16.msra.mxu0 0
        %606 = vmatprep.subr.bf16.mxu0 0
        %607 = vmatpush1.bf16.msra.mxu0 0
        %608 = vmatprep.subr.bf16.mxu0 0
        %609 = vmatpush1.bf16.msra.mxu0 0
        %610 = vmatprep.subr.bf16.mxu0 0
        %611 = vmatpush1.bf16.msra.mxu0 0
        %612 = vmatprep.subr.bf16.mxu0 0
        %613 = vmatpush1.bf16.msra.mxu0 0
        %614 = vmatprep.subr.bf16.mxu0 0
        %615 = vmatpush1.bf16.msra.mxu0 0
        %616 = vmatprep.subr.bf16.mxu0 0
        %617 = vmatpush1.bf16.msra.mxu0 0
        %618 = vmatprep.subr.bf16.mxu0 0
        %619 = vmatpush1.bf16.msra.mxu0 0
        %620 = vmatprep.subr.bf16.mxu0 0
        %621 = vmatpush1.bf16.msra.mxu0 0
        %622 = vmatprep.mubr.bf16.mxu0 0
        %623 = vmatmul.mubr.bf16.gmra.mrb[0].mxu0 %v584
        %v624 = vpop.f32.mrb[0].mxu0
        %v625 = vadd.f32 0.0, %v624
        %v626 = vpop.f32.mrb[0].mxu0
        %v627 = vpop.f32.mrb[0].mxu0
        %v628 = vpop.f32.mrb[0].mxu0
        %629 = vdwg.mxu0
        %v630 = vld [vmem:[#allocation2] sm:$0xff]
        %v631 = vpack.c.bf16 %v625, %v625
        %v632 = vld [vmem:[%s338] sm:$0xf]
        %v633 = vld [vmem:[%s338 + $0x4] sm:$0xf]
        %v636 = vunpack.c.l.b16 %v632
        %v637 = vunpack.c.l.b16 %v633
        %v638 = vpack.c.b16 %v637, %v636
        %v641 = vsel %vm522, %v631, 0
        %643 = vmatprep.subr.bf16.mxu0 0
        %644 = vmatpush1.bf16.msra.mxu0 %v638
        %645 = vmatprep.subr.bf16.mxu0 0
        %646 = vmatpush1.bf16.msra.mxu0 0
        %647 = vmatprep.subr.bf16.mxu0 0
        %648 = vmatpush1.bf16.msra.mxu0 0
        %649 = vmatprep.subr.bf16.mxu0 0
        %650 = vmatpush1.bf16.msra.mxu0 0
        %651 = vmatprep.subr.bf16.mxu0 0
        %652 = vmatpush1.bf16.msra.mxu0 0
        %653 = vmatprep.subr.bf16.mxu0 0
        %654 = vmatpush1.bf16.msra.mxu0 0
        %655 = vmatprep.subr.bf16.mxu0 0
        %656 = vmatpush1.bf16.msra.mxu0 0
        %657 = vmatprep.subr.bf16.mxu0 0
        %658 = vmatpush1.bf16.msra.mxu0 0
        %659 = vmatprep.subr.bf16.mxu0 0
        %660 = vmatpush1.bf16.msra.mxu0 0
        %661 = vmatprep.subr.bf16.mxu0 0
        %662 = vmatpush1.bf16.msra.mxu0 0
        %663 = vmatprep.subr.bf16.mxu0 0
        %664 = vmatpush1.bf16.msra.mxu0 0
        %665 = vmatprep.subr.bf16.mxu0 0
        %666 = vmatpush1.bf16.msra.mxu0 0
        %667 = vmatprep.subr.bf16.mxu0 0
        %668 = vmatpush1.bf16.msra.mxu0 0
        %669 = vmatprep.subr.bf16.mxu0 0
        %670 = vmatpush1.bf16.msra.mxu0 0
        %671 = vmatprep.subr.bf16.mxu0 0
        %672 = vmatpush1.bf16.msra.mxu0 0
        %673 = vmatprep.subr.bf16.mxu0 0
        %674 = vmatpush1.bf16.msra.mxu0 0
        %675 = vmatprep.mubr.bf16.mxu0 0
        %676 = vmatmul.mubr.bf16.gmra.mrb[0].mxu0 %v641
        %v677 = vpop.f32.mrb[0].mxu0
        %v678 = vadd.f32 0.0, %v677
        %v679 = vpop.f32.mrb[0].mxu0
        %v680 = vpop.f32.mrb[0].mxu0
        %v681 = vpop.f32.mrb[0].mxu0
        %682 = vdwg.mxu0
        %v683 = vadd.f32 %v630, %v678
        %684 = vst.msk [vmem:[#allocation2] sm:$0xff] %vm364, %v683
        %p685 = scmp.eq.s32.totalorder %s25, 3
        // Predicated region
        $region49: #{tpu_custom_call.1} parent=43 // pred_check
          %p686 = pneg %p685
        $region50: #{tpu_custom_call.1} parent=43 // pred_check_branch
          %688 = sbr.rel (%p686) target = $region52
        $region51: #{tpu_custom_call.1} parent=43 // pred_region
          %v689 = vld [vmem:[#allocation2] sm:$0xff]
          %v690 = vld [vmem:[%s5] sm:$0x1]
          %v692 = vlaneseq
          %v693 = vshrl.u32 %v692, 7
          %v694 = vsub.s32 0, %v693
          %v695 = vrot.slane %v690, %v694
          %v697 = vadd.f32 %v689, %v695
          %698 = vst.msk [vmem:[%s314] sm:$0xff] %vm364, %v697
        $region52: #{tpu_custom_call.1} parent=43 // pred_fallthru
          _
        %s699 = sand.u32 %s191, 1
        %s700 = scalar_lea.sflag [#allocation4], %s699
        %s701 = sand.u32 %s191, 1
        %s702 = smul.addr %s701, 8
        %s703 = scalar_lea.vmem [#allocation3], %s702
        // Predicated region
        $region53: #{tpu_custom_call.1} parent=43 // pred_check
          %p704 = pneg %p201
        $region54: #{tpu_custom_call.1} parent=43 // pred_check_branch
          %706 = sbr.rel (%p704) target = $region56
        $region55: #{tpu_custom_call.1} parent=43 // pred_region
          %s708 = ssub.s32 128, 128
          %709 = vsyncadd %s700, %s708
          %s710 = smul.addr %s24, 128
          %s711 = scalar_lea.hbm %s6, %s710
          %s713 = sshll.u32 %s703, 4
          %s714 = int_to_ptr.vmem [resolvable:$true] %s713
          %716 = dma.vmem_to_hbm [thread:$0]  %s714, 128, %s711, %s700
        $region56: #{tpu_custom_call.1} parent=43 // pred_fallthru
          _
      $region44: #{tpu_custom_call.1} parent=5 // pred_fallthru
        _
      %p717 = scmp.le.s32.totalorder 2, %s15
      // Predicated region
      $region57: #{tpu_custom_call.1} parent=5 // pred_check
        %p718 = pneg %p717
      $region58: #{tpu_custom_call.1} parent=5 // pred_check_branch
        %720 = sbr.rel (%p718) target = $region60
      $region59: #{tpu_custom_call.1} parent=5 // pred_region
        %s721 = ssub.s32 %s15, 2
        // Predicated region
        $region61: #{tpu_custom_call.1} parent=59 // pred_check
          %p722 = pneg %p207
        $region62: #{tpu_custom_call.1} parent=59 // pred_check_branch
          %724 = sbr.rel (%p722) target = $region64
        $region63: #{tpu_custom_call.1} parent=59 // pred_region
          %s725 = sand.u32 %s192, 1
          %s726 = scalar_lea.sflag [#allocation4], %s725
          %s727 = sand.u32 %s192, 1
          %s728 = smul.addr %s727, 8
          %s729 = scalar_lea.vmem [#allocation3], %s728
          %730 = dma.done %s726, 128
        $region64: #{tpu_custom_call.1} parent=59 // pred_fallthru
          _
      $region60: #{tpu_custom_call.1} parent=5 // pred_fallthru
        _
    $region6: #{tpu_custom_call.1} parent=1 // loop_footer
      %s19 = sadd.s32 1, %s15
    $region7: #{tpu_custom_call.1} parent=1 // loop_footer_branch
      %14 = sbr.rel target = $region3
    $region8: #{tpu_custom_call.1} parent=1 // loop_exit
      _
    %731 = vsyncpa [#allocation4], 1
    %s732 = scalar_lea.sflag [#allocation4], 1
    %733 = vsyncpa %s732, 1

</llo_original>
